<compile_context>
chip_gen: v7x
topology: tpu7x:2x2x1
jax: 0.10.0
libtpu: 0.0.40
codegen_flags: <defaults>
</compile_context>

<pallas_src>
import functools

import jax
import jax.numpy as jnp
from jax.experimental import pallas as pl
from jax.experimental.pallas import tpu as pltpu


def _num_tensorcores():
    """2 TensorCores per chip on v7x, 1 on v5e/v6e; perf policy only."""
    try:
        kind = jax.devices()[0].device_kind.lower()
    except Exception:
        return 1
    return 2 if ("v7" in kind or "7x" in kind) else 1


def _multitask_loss_kernel(out_ref, lab_ref, part_ref, *, batch, blk):
    """out_ref/lab_ref: (C, blk) blocks, batch on the 128-lane axis.
    part_ref: (2, 128) lane-folded partial sums for this block
              (row 0 = task-1 BCE, row 1 = masked task-2 CE)."""
    outs = out_ref[...].astype(jnp.float32)          # (C, blk)
    labs = lab_ref[...].astype(jnp.float32)          # (C, blk)

    # Validity mask for the ragged final block (only compiled in if needed).
    ragged = (batch % blk) != 0
    if ragged:
        lane = jax.lax.broadcasted_iota(jnp.int32, (1, blk), 1)
        valid = (pl.program_id(0) * blk + lane) < batch        # (1, blk) bool

    # ---- task 1: stable BCE-with-logits on row 0 ----
    # == -(y*log sigma(z) + (1-y)*log(1-sigma(z))) for finite results.
    z = outs[0:1, :]                                   # (1, blk)
    y1 = labs[0:1, :]
    l1 = jnp.maximum(z, 0.0) - y1 * z + jnp.log1p(jnp.exp(-jnp.abs(z)))
    if ragged:
        l1 = jnp.where(valid, l1, 0.0)

    # ---- task 2: masked log-softmax cross-entropy on rows 1: ----
    logits = outs[1:, :]                               # (C-1, blk)
    m = jnp.max(logits, axis=0, keepdims=True)         # (1, blk)
    lse = m + jnp.log(jnp.sum(jnp.exp(logits - m), axis=0, keepdims=True))
    ce = -jnp.sum(labs[1:, :] * (logits - lse), axis=0, keepdims=True)   # (1, blk)
    keep = labs[1:2, :] != -1.0                        # torch.where(labels[:,1]==-1, 0, 1)
    if ragged:
        keep = jnp.logical_and(keep, valid)
    l2 = jnp.where(keep, ce, 0.0)

    # ---- in-kernel lane reduction: (1, blk) -> (1, 128) halving add tree ----
    # blk is a power of two >= 128, so every slice is 128-lane aligned.
    def fold_to_128(v):
        w = blk
        while w > 128:
            w //= 2
            v = v[:, :w] + v[:, w:]
        return v

    part_ref[...] = jnp.concatenate([fold_to_128(l1), fold_to_128(l2)], axis=0)


def _multitask_loss_from_transposed(outs_t, labs_t, batch, blk):
    """Core pallas_call on lane-dense (C, B) f32 inputs; returns (2,) sums."""
    C, B = outs_t.shape
    nblk = pl.cdiv(batch, blk)

    kernel = functools.partial(_multitask_loss_kernel, batch=batch, blk=blk)
    parts = pl.pallas_call(
        kernel,
        out_shape=jax.ShapeDtypeStruct((2, nblk * 128), jnp.float32),
        grid_spec=pltpu.PrefetchScalarGridSpec(
            num_scalar_prefetch=0,
            grid=(nblk,),
            in_specs=[pl.BlockSpec((C, blk), lambda i: (0, i)),
                      pl.BlockSpec((C, blk), lambda i: (0, i))],
            out_specs=pl.BlockSpec((2, 128), lambda i: (0, i)),
        ),
        compiler_params=pltpu.CompilerParams(
            dimension_semantics=("parallel",),   # independent blocks -> v7x megacore
            vmem_limit_bytes=32 * 1024 * 1024,   # v5e default scoped VMEM is 16 MiB
        ),
    )(outs_t, labs_t)

    return jnp.sum(parts, axis=1)                      # (2,)


def multitask_loss(outputs, labels, task, *, blk=None, max_blk=32768):
    """Pallas implementation of MultiTaskLoss(task).forward(outputs, labels).

    outputs, labels: (B, C); column 0 = binary task, columns 1: = multi-class
    task (labels[:, 1] == -1 marks 'no task-2 label').  `task` must be static.
    """
    B, C = outputs.shape
    assert labels.shape == (B, C)

    # Block-size policy: one block on single-TC chips when it fits, >=2 blocks
    # on v7x so both TensorCores get work; always a power of two >= 128 lanes,
    # capped so double-buffered inputs stay ~8 MiB of VMEM on every generation.
    if blk is None:
        n_tc = _num_tensorcores()
        target = -(-B // n_tc)
        blk = min(max_blk, max(128, pl.next_power_of_2(target)))
    else:
        blk = min(max_blk, max(128, pl.next_power_of_2(int(blk))))

    # Lane-dense layout: batch on the 128-lane axis.  The cast fuses into this
    # single transpose pass; there is no separate pad pass (ragged final block
    # is masked in-kernel).  Producers that already hold (C, B) f32 can call
    # _multitask_loss_from_transposed directly and skip this pass.
    outs_t = jnp.transpose(outputs.astype(jnp.float32))   # (C, B)
    labs_t = jnp.transpose(labels.astype(jnp.float32))    # (C, B)

    sums = _multitask_loss_from_transposed(outs_t, labs_t, B, blk)
    loss_t1 = sums[0] / float(B)
    loss_t2 = sums[1] / float(B)
    # Static Python `task` blend, exactly as in the PyTorch module.
    return (loss_t1 * float(task != 2) + loss_t2) / 2.0


def multitask_loss_ref(outputs, labels, task):
    """Pure-JAX reference mirroring the PyTorch forward exactly."""
    o_t1 = 1.0 / (1.0 + jnp.exp(-outputs[:, 0]))
    loss_t1 = jnp.mean(
        -(labels[:, 0] * jnp.log(o_t1) + (1.0 - labels[:, 0]) * jnp.log(1.0 - o_t1)))
    o_t2 = jax.nn.softmax(outputs[:, 1:], axis=-1)
    loss_t2 = jnp.mean(
        -(jnp.sum(labels[:, 1:] * jnp.log(o_t2), axis=-1))
        * jnp.where(labels[:, 1] == -1, 0.0, 1.0))
    return (loss_t1 * float(task != 2) + loss_t2) / 2.0


if __name__ == "__main__":
    B, C = 200, 9   # 1 binary logit + 8-way classification head; B not a multiple of 128
    key = jax.random.PRNGKey(0)
    k1, k2, k3 = jax.random.split(key, 3)

    outputs = jax.random.normal(k1, (B, C), dtype=jnp.float32)

    y_bin = jax.random.bernoulli(k2, 0.5, (B,)).astype(jnp.float32)      # column 0
    cls = jax.random.randint(k3, (B,), 0, C - 1)
    y_cls = jax.nn.one_hot(cls, C - 1, dtype=jnp.float32)                # columns 1:
    # Mark a few samples as "no task-2 label" with the -1 sentinel the module
    # masks out via torch.where(labels[:, 1] == -1, 0, 1).
    y_cls = y_cls.at[-5:, :].set(-1.0)
    labels = jnp.concatenate([y_bin[:, None], y_cls], axis=1)

    task = 1
    ref = multitask_loss_ref(outputs, labels, task)

    # Default block policy (single block on v5e/v6e, >=2 blocks on v7x);
    # exercises the ragged-final-block mask since 200 % 128 != 0.
    loss = jax.block_until_ready(multitask_loss(outputs, labels, task))
    assert jnp.allclose(loss, ref, atol=1e-5, rtol=1e-5), (loss, ref)

    # Forced small block: multi-block "parallel" grid + ragged final block
    # + in-kernel (1, blk)->(1, 128) lane fold with blk == 128.
    loss_small = jax.block_until_ready(multitask_loss(outputs, labels, task, blk=128))
    assert jnp.allclose(loss_small, ref, atol=1e-5, rtol=1e-5), (loss_small, ref)

    print("KERNEL_OK")
</pallas_src>

<mosaic_0001>
module attributes {stable_mosaic.version = 11 : i64} {
  func.func @_multitask_loss_kernel(%arg0: i32, %arg1: memref<9x256xf32, #tpu.memory_space<vmem>>, %arg2: memref<9x256xf32, #tpu.memory_space<vmem>>, %arg3: memref<2x128xf32, #tpu.memory_space<vmem>>) attributes {dimension_semantics = [#tpu.dimension_semantics<parallel>], iteration_bounds = array<i64: 1>, scalar_prefetch = 0 : i64, scratch_operands = 0 : i64, tpu.core_type = #tpu.core_type<tc>, window_params = [{transform_indices = @transform_0, window_bounds = array<i64: 9, 256>}, {transform_indices = @transform_1, window_bounds = array<i64: 9, 256>}, {transform_indices = @transform_2, window_bounds = array<i64: 2, 128>}]} {
    %c0 = arith.constant 0 : index
    %c0_0 = arith.constant 0 : index
    %0 = vector.load %arg1[%c0, %c0_0] : memref<9x256xf32, #tpu.memory_space<vmem>>, vector<9x256xf32>
    %c0_1 = arith.constant 0 : index
    %c0_2 = arith.constant 0 : index
    %1 = vector.load %arg2[%c0_1, %c0_2] : memref<9x256xf32, #tpu.memory_space<vmem>>, vector<9x256xf32>
    %2 = tpu.iota {dimensions = array<i32: 1>} : vector<1x256xi32>
    %c256_i32 = arith.constant 256 : i32
    %3 = arith.muli %arg0, %c256_i32 : i32
    %4 = vector.broadcast %3 : i32 to vector<1x256xi32>
    %5 = arith.addi %4, %2 : vector<1x256xi32>
    %c200_i32 = arith.constant 200 : i32
    %6 = vector.broadcast %c200_i32 : i32 to vector<1x256xi32>
    %7 = arith.cmpi slt, %5, %6 : vector<1x256xi32>
    %8 = vector.extract_strided_slice %0 {offsets = [0, 0], sizes = [1, 256], strides = [1, 1]} : vector<9x256xf32> to vector<1x256xf32>
    %9 = vector.extract_strided_slice %1 {offsets = [0, 0], sizes = [1, 256], strides = [1, 1]} : vector<9x256xf32> to vector<1x256xf32>
    %cst = arith.constant 0.000000e+00 : f32
    %10 = vector.broadcast %cst : f32 to vector<1x256xf32>
    %11 = arith.maximumf %8, %10 : vector<1x256xf32>
    %12 = arith.mulf %9, %8 : vector<1x256xf32>
    %13 = arith.subf %11, %12 : vector<1x256xf32>
    %14 = math.absf %8 : vector<1x256xf32>
    %cst_3 = arith.constant 0.000000e+00 : f32
    %15 = vector.broadcast %cst_3 : f32 to vector<1x256xf32>
    %16 = arith.subf %15, %14 : vector<1x256xf32>
    %17 = math.exp %16 : vector<1x256xf32>
    %18 = math.log1p %17 : vector<1x256xf32>
    %19 = arith.addf %13, %18 : vector<1x256xf32>
    %cst_4 = arith.constant 0.000000e+00 : f32
    %20 = vector.broadcast %cst_4 : f32 to vector<1x256xf32>
    %21 = arith.select %7, %19, %20 : vector<1x256xi1>, vector<1x256xf32>
    %22 = vector.extract_strided_slice %0 {offsets = [1, 0], sizes = [8, 256], strides = [1, 1]} : vector<9x256xf32> to vector<8x256xf32>
    %cst_5 = arith.constant dense<0xFF800000> : vector<256xf32>
    %23 = vector.multi_reduction <maximumf>, %22, %cst_5 [0] : vector<8x256xf32> to vector<256xf32>
    %24 = vector.shape_cast %23 : vector<256xf32> to vector<1x256xf32>
    %25 = vector.broadcast %24 : vector<1x256xf32> to vector<8x256xf32>
    %26 = arith.subf %22, %25 : vector<8x256xf32>
    %27 = math.exp %26 : vector<8x256xf32>
    %cst_6 = arith.constant dense<0.000000e+00> : vector<256xf32>
    %28 = vector.multi_reduction <add>, %27, %cst_6 [0] : vector<8x256xf32> to vector<256xf32>
    %29 = vector.shape_cast %28 : vector<256xf32> to vector<1x256xf32>
    %30 = math.log %29 : vector<1x256xf32>
    %31 = arith.addf %24, %30 : vector<1x256xf32>
    %32 = vector.extract_strided_slice %1 {offsets = [1, 0], sizes = [8, 256], strides = [1, 1]} : vector<9x256xf32> to vector<8x256xf32>
    %33 = vector.broadcast %31 : vector<1x256xf32> to vector<8x256xf32>
    %34 = arith.subf %22, %33 : vector<8x256xf32>
    %35 = arith.mulf %32, %34 : vector<8x256xf32>
    %cst_7 = arith.constant dense<0.000000e+00> : vector<256xf32>
    %36 = vector.multi_reduction <add>, %35, %cst_7 [0] : vector<8x256xf32> to vector<256xf32>
    %37 = vector.shape_cast %36 : vector<256xf32> to vector<1x256xf32>
    %cst_8 = arith.constant 0.000000e+00 : f32
    %38 = vector.broadcast %cst_8 : f32 to vector<1x256xf32>
    %39 = arith.subf %38, %37 : vector<1x256xf32>
    %40 = vector.extract_strided_slice %1 {offsets = [1, 0], sizes = [1, 256], strides = [1, 1]} : vector<9x256xf32> to vector<1x256xf32>
    %cst_9 = arith.constant -1.000000e+00 : f32
    %41 = vector.broadcast %cst_9 : f32 to vector<1x256xf32>
    %42 = arith.cmpf one, %40, %41 : vector<1x256xf32>
    %43 = arith.andi %42, %7 : vector<1x256xi1>
    %cst_10 = arith.constant 0.000000e+00 : f32
    %44 = vector.broadcast %cst_10 : f32 to vector<1x256xf32>
    %45 = arith.select %43, %39, %44 : vector<1x256xi1>, vector<1x256xf32>
    %46 = vector.extract_strided_slice %21 {offsets = [0, 0], sizes = [1, 128], strides = [1, 1]} : vector<1x256xf32> to vector<1x128xf32>
    %47 = vector.extract_strided_slice %21 {offsets = [0, 128], sizes = [1, 128], strides = [1, 1]} : vector<1x256xf32> to vector<1x128xf32>
    %48 = arith.addf %46, %47 : vector<1x128xf32>
    %49 = vector.extract_strided_slice %45 {offsets = [0, 0], sizes = [1, 128], strides = [1, 1]} : vector<1x256xf32> to vector<1x128xf32>
    %50 = vector.extract_strided_slice %45 {offsets = [0, 128], sizes = [1, 128], strides = [1, 1]} : vector<1x256xf32> to vector<1x128xf32>
    %51 = arith.addf %49, %50 : vector<1x128xf32>
    %52 = tpu.concatenate %48, %51 in 0 : vector<1x128xf32>, vector<1x128xf32> -> vector<2x128xf32>
    %c0_11 = arith.constant 0 : index
    %c0_12 = arith.constant 0 : index
    %53 = vector.load %arg3[%c0_11, %c0_12] : memref<2x128xf32, #tpu.memory_space<vmem>>, vector<2x128xf32>
    tpu.vector_store %arg3[%c0_11, %c0_12], %52 {strides = array<i32>} : memref<2x128xf32, #tpu.memory_space<vmem>>, vector<2x128xf32>,
    return
  }
  func.func @transform_0(%arg0: i32) -> (i32, i32) {
    %c0_i32 = arith.constant 0 : i32
    %c0_i32_0 = arith.constant 0 : i32
    return %c0_i32, %arg0 : i32, i32
  }
  func.func @transform_1(%arg0: i32) -> (i32, i32) {
    %c0_i32 = arith.constant 0 : i32
    %c0_i32_0 = arith.constant 0 : i32
    return %c0_i32, %arg0 : i32, i32
  }
  func.func @transform_2(%arg0: i32) -> (i32, i32) {
    %c0_i32 = arith.constant 0 : i32
    %c0_i32_0 = arith.constant 0 : i32
    return %c0_i32, %arg0 : i32, i32
  }
}

</mosaic_0001>

<llo_original>
// kernel: tpu_custom_call.1
$region0: #{tpu_custom_call.1}
  #allocation0 [shape = 'u32[]', space=smem, size = 0x4, offset = 0x4, fixed_abs, tag = 'smem constant byte address 0x4 - core index']
  #allocation1 [shape = 'u32[144,128]{1,0:T(1,128)}', space=vmem, size = 0x12000, scoped, tag = 'internal scratch']
  %s0 = inlined_call_operand.hbm [shape: f32[9,200], index: 0, kind: input, shape index: {}]
  %s1 = inlined_call_operand.hbm [shape: f32[9,200], index: 1, kind: input, shape index: {}]
  %s2 = inlined_call_operand.hbm [shape: f32[2,128], index: 2, kind: output, shape index: {}]
  %s3 = sld [smem:[#allocation0]]
  $region26: #{tpu_custom_call.1} parent=0
    _
  %s5 = ssub.s32 1, %s3
  %s6 = scalar_select 0, %s5, %s3
  $region1: #{tpu_custom_call.1} parent=0
    #allocation2 [shape = 'u8[16384]{0}', space=vmem, size = 0x4000, scoped, tag = 'input window, operand 0, single buffered']
    #allocation3 [shape = 's32[1]{0}', space=sflag, size = 0x4, scoped, tag = 'scoped memory for tpu_custom_call.1']
    #allocation4 [shape = 's32[1]{0}', space=sflag, size = 0x4, scoped, tag = 'scoped memory for tpu_custom_call.1']
    #allocation5 [shape = 'u8[16384]{0}', space=vmem, size = 0x4000, scoped, tag = 'input window, operand 1, single buffered']
    #allocation6 [shape = 's32[1]{0}', space=sflag, size = 0x4, scoped, tag = 'scoped memory for tpu_custom_call.1']
    #allocation7 [shape = 'u8[1024]{0}', space=vmem, size = 0x400, scoped, tag = 'output window, operand 0, single buffered']
    %7 = vsyncpa [#allocation3], 0
    %8 = vsyncpa [#allocation6], 0
    %9 = vsyncpa [#allocation4], 0
    // Predicated region
    $region2: #{tpu_custom_call.1} parent=1 // pred_check
      _
    $region3: #{tpu_custom_call.1} parent=1 // pred_check_branch
      %11 = sbr.rel (0) target = $region5
    $region4: #{tpu_custom_call.1} parent=1 // pred_region
      %s13 = ssub.s32 512, 512
      %14 = vsyncadd [#allocation3], %s13
      %s15 = sshll.u32 [#allocation2], 4
      %s16 = int_to_ptr.vmem [resolvable:$true] %s15
      %21 = dma.hbm_to_vmem [thread:$0]  %s0, 512, %s16, [#allocation3], 256, 256, 16
    $region5: #{tpu_custom_call.1} parent=1 // pred_fallthru
      _
    // Predicated region
    $region6: #{tpu_custom_call.1} parent=1 // pred_check
      _
    $region7: #{tpu_custom_call.1} parent=1 // pred_check_branch
      %23 = sbr.rel (0) target = $region9
    $region8: #{tpu_custom_call.1} parent=1 // pred_region
      %s25 = ssub.s32 512, 512
      %26 = vsyncadd [#allocation6], %s25
      %s27 = sshll.u32 [#allocation5], 4
      %s28 = int_to_ptr.vmem [resolvable:$true] %s27
      %33 = dma.hbm_to_vmem [thread:$0]  %s1, 512, %s28, [#allocation6], 256, 256, 16
    $region9: #{tpu_custom_call.1} parent=1 // pred_fallthru
      _
    // Predicated region
    $region10: #{tpu_custom_call.1} parent=1 // pred_check
      _
    $region11: #{tpu_custom_call.1} parent=1 // pred_check_branch
      %35 = sbr.rel (0) target = $region13
    $region12: #{tpu_custom_call.1} parent=1 // pred_region
      %36 = dma.done [#allocation3], 512
    $region13: #{tpu_custom_call.1} parent=1 // pred_fallthru
      _
    // Predicated region
    $region14: #{tpu_custom_call.1} parent=1 // pred_check
      _
    $region15: #{tpu_custom_call.1} parent=1 // pred_check_branch
      %38 = sbr.rel (0) target = $region17
    $region16: #{tpu_custom_call.1} parent=1 // pred_region
      %39 = dma.done [#allocation6], 512
    $region17: #{tpu_custom_call.1} parent=1 // pred_fallthru
      _
    %v40 = vld [vmem:[#allocation2] sm:$0xff]
    %v41 = vld [vmem:[#allocation2 + $0x8] sm:$0xff]
    %v42 = vld [vmem:[#allocation2 + $0x10] sm:$0x1]
    %v43 = vld [vmem:[#allocation2 + $0x18] sm:$0x1]
    %v44 = vld [vmem:[#allocation5] sm:$0xff]
    %v45 = vld [vmem:[#allocation5 + $0x8] sm:$0xff]
    %v46 = vld [vmem:[#allocation5 + $0x10] sm:$0x1]
    %v47 = vld [vmem:[#allocation5 + $0x18] sm:$0x1]
    %v48 = vlaneseq
    %v49 = vand.u32 %v48, 127
    %v50 = vadd.s32 %v49, 128
    %s51 = smul.u32 0, 256
    %v52 = vstv %s51
    %v53 = vadd.s32 %v52, %v49
    %v54 = vadd.s32 %v52, %v50
    %vm55 = vcmp.lt.s32.totalorder %v53, 200
    %vm56 = vcmp.lt.s32.totalorder %v54, 200
    %v57 = vmax.f32 %v40, 0.0
    %v58 = vmax.f32 %v41, 0.0
    %v59 = vmul.f32 %v44, %v40
    %v60 = vmul.f32 %v45, %v41
    %v61 = vsub.f32 %v57, %v59
    %v62 = vsub.f32 %v58, %v60
    %v63 = vand.u32 2147483647, %v40
    %v64 = vand.u32 2147483647, %v41
    %v65 = vsub.f32 0.0, %v63
    %v66 = vsub.f32 0.0, %v64
    %v67 = vmul.f32 %v65, 1.442695
    %v68 = vpow.pop %v67
    %v69 = vmul.f32 %v66, 1.442695
    %v70 = vpow.pop %v69
    %v71 = vadd.f32 %v68, 1.0
    %v72 = vlog2.pop %v71
    %v73 = vmul.f32 %v72, 0.6931472
    %v74 = vmul.f32 -0.5, %v68
    %v75 = vadd.f32 %v74, 1.0
    %v76 = vmul.f32 %v75, %v68
    %v77 = vand.u32 2147483647, %v68
    %vm78 = vcmp.lt.f32.partialorder %v77, 0.0004427343
    %v79 = vsel %vm78, %v76, %v73
    %v80 = vadd.f32 %v70, 1.0
    %v81 = vlog2.pop %v80
    %v82 = vmul.f32 %v81, 0.6931472
    %v83 = vmul.f32 -0.5, %v70
    %v84 = vadd.f32 %v83, 1.0
    %v85 = vmul.f32 %v84, %v70
    %v86 = vand.u32 2147483647, %v70
    %vm87 = vcmp.lt.f32.partialorder %v86, 0.0004427343
    %v88 = vsel %vm87, %v85, %v82
    %v89 = vadd.f32 %v61, %v79
    %v90 = vadd.f32 %v62, %v88
    %v91 = vsel %vm55, %v89, 0.0
    %v92 = vsel %vm56, %v90, 0.0
    %vm93 = vcmask 1047553
    %v94 = vsel %vm93, %v40, -inf
    %vm95 = vcmask 1040384
    %v96 = vsel %vm95, %v42, -inf
    %v97 = vmax.f32 %v94, %v96
    %v98 = vrot.slane %v97, 4
    %v99 = vmax.f32 %v97, %v98
    %v100 = vrot.slane %v99, 2
    %v101 = vmax.f32 %v99, %v100
    %v102 = vrot.slane %v101, 1
    %v103 = vmax.f32 %v101, %v102
    %v104 = vsel %vm93, %v41, -inf
    %v105 = vsel %vm95, %v43, -inf
    %v106 = vmax.f32 %v104, %v105
    %v107 = vrot.slane %v106, 4
    %v108 = vmax.f32 %v106, %v107
    %v109 = vrot.slane %v108, 2
    %v110 = vmax.f32 %v108, %v109
    %v111 = vrot.slane %v110, 1
    %v112 = vmax.f32 %v110, %v111
    %v113 = vsub.f32 %v40, %v103
    %v114 = vsub.f32 %v41, %v112
    %v115 = vsub.f32 %v42, %v103
    %v116 = vsub.f32 %v43, %v112
    %v117 = vmul.f32 %v113, 1.442695
    %v118 = vpow.pop %v117
    %v119 = vmul.f32 %v114, 1.442695
    %v120 = vpow.pop %v119
    %v121 = vmul.f32 %v115, 1.442695
    %v122 = vpow.pop %v121
    %v123 = vmul.f32 %v116, 1.442695
    %v124 = vpow.pop %v123
    %vm129 = vcmask 1046528
    %v130 = vrot.slane %v118, 1
    %v131 = vrot.slane %v122, 1
    %v132 = vsel %vm129, %v130, %v131
    %v133 = vrot.slane %v120, 1
    %v134 = vrot.slane %v124, 1
    %v135 = vsel %vm129, %v133, %v134
    %v138 = vrot.slane %v132, 4
    %v139 = vadd.f32 %v132, %v138
    %v140 = vrot.slane %v139, 2
    %v141 = vadd.f32 %v139, %v140
    %v142 = vrot.slane %v141, 1
    %v143 = vadd.f32 %v141, %v142
    %v144 = vrot.slane %v135, 4
    %v145 = vadd.f32 %v135, %v144
    %v146 = vrot.slane %v145, 2
    %v147 = vadd.f32 %v145, %v146
    %v148 = vrot.slane %v147, 1
    %v149 = vadd.f32 %v147, %v148
    %v150 = vlog2.pop %v143
    %v151 = vmul.f32 %v150, 0.6931472
    %v152 = vlog2.pop %v149
    %v153 = vmul.f32 %v152, 0.6931472
    %v154 = vadd.f32 %v103, %v151
    %v155 = vadd.f32 %v112, %v153
    %v156 = vsub.f32 %v40, %v154
    %v157 = vsub.f32 %v41, %v155
    %v158 = vsub.f32 %v42, %v154
    %v159 = vsub.f32 %v43, %v155
    %v160 = vmul.f32 %v44, %v156
    %v161 = vmul.f32 %v45, %v157
    %v162 = vmul.f32 %v46, %v158
    %v163 = vmul.f32 %v47, %v159
    %v168 = vrot.slane %v160, 1
    %v169 = vrot.slane %v162, 1
    %v170 = vsel %vm129, %v168, %v169
    %v171 = vrot.slane %v161, 1
    %v172 = vrot.slane %v163, 1
    %v173 = vsel %vm129, %v171, %v172
    %v176 = vrot.slane %v170, 4
    %v177 = vadd.f32 %v170, %v176
    %v178 = vrot.slane %v177, 2
    %v179 = vadd.f32 %v177, %v178
    %v180 = vrot.slane %v179, 1
    %v181 = vadd.f32 %v179, %v180
    %v182 = vrot.slane %v173, 4
    %v183 = vadd.f32 %v173, %v182
    %v184 = vrot.slane %v183, 2
    %v185 = vadd.f32 %v183, %v184
    %v186 = vrot.slane %v185, 1
    %v187 = vadd.f32 %v185, %v186
    %v188 = vsub.f32 0.0, %v181
    %v189 = vsub.f32 0.0, %v187
    %vm190 = vcmp.ne.f32.partialorder %v44, -1.0
    %vm191 = vcmp.ne.f32.partialorder %v45, -1.0
    %vm192 = vmand %vm190, %vm55
    %vm193 = vmand %vm191, %vm56
    %v194 = vsel %vm192, %v188, 0.0
    %v195 = vsel %vm193, %v189, 0.0
    %v196 = vadd.f32 %v91, %v92
    %v197 = vadd.f32 %v194, %v195
    %v198 = vsel %vm95, %v196, %v197
    %199 = vst [vmem:[#allocation7] sm:$0x3] %v198
    // Predicated region
    $region18: #{tpu_custom_call.1} parent=1 // pred_check
      _
    $region19: #{tpu_custom_call.1} parent=1 // pred_check_branch
      %201 = sbr.rel (0) target = $region21
    $region20: #{tpu_custom_call.1} parent=1 // pred_region
      %s203 = ssub.s32 32, 32
      %204 = vsyncadd [#allocation4], %s203
      %s206 = sshll.u32 [#allocation7], 4
      %s207 = int_to_ptr.vmem [resolvable:$true] %s206
      %209 = dma.vmem_to_hbm [thread:$0]  %s207, 32, %s2, [#allocation4]
    $region21: #{tpu_custom_call.1} parent=1 // pred_fallthru
      _
    // Predicated region
    $region22: #{tpu_custom_call.1} parent=1 // pred_check
      _
    $region23: #{tpu_custom_call.1} parent=1 // pred_check_branch
      %211 = sbr.rel (0) target = $region25
    $region24: #{tpu_custom_call.1} parent=1 // pred_region
      %212 = dma.done [#allocation4], 32
    $region25: #{tpu_custom_call.1} parent=1 // pred_fallthru
      _
    %213 = vsyncpa [#allocation3], 1
    %214 = vsyncpa [#allocation6], 1
    %215 = vsyncpa [#allocation4], 1

</llo_original>
